<compile_context>
chip_gen: v7x
topology: tpu7x:2x2x1
jax: 0.10.0
libtpu: 0.0.40
codegen_flags: <defaults>
</compile_context>

<pallas_src>
import numpy as np
import jax
import jax.numpy as jnp
from jax.experimental import pallas as pl
from jax.experimental.pallas import tpu as pltpu

# Below this payload size the custom-call + dispatch overhead dominates and a
# fused XLA gather is strictly faster.
_PALLAS_MIN_BYTES = 1 << 18  # 256 KiB
_BATCH_TILE = 256            # sublane tile for large B (multiple of 8)


def _gather_joints_kernel(tgt_ref, x_ref, out_ref):
    # tgt_ref : VMEM (1, K*D) int32 -- flattened source column per output column
    # x_ref   : VMEM (TB, J*D)      -- joints rows for this batch tile (no transpose)
    # out_ref : VMEM (TB, K*D)      -- gathered rows for this batch tile
    jd = x_ref.shape[1]
    kd = out_ref.shape[1]
    # (J*D, K*D) selection matrix: sel[r, c] = 1 iff r == target[c].
    # Rebuilt per grid step (cheap VPU filler under the DMA/MXU; see header).
    r = jax.lax.broadcasted_iota(jnp.int32, (jd, kd), 0)
    sel = (r == tgt_ref[...]).astype(x_ref.dtype)
    # Single MXU matmul does the whole gather; accumulation in f32 is exact
    # because each output element has exactly one nonzero (0/1) multiplier.
    out_ref[...] = jnp.dot(
        x_ref[...], sel, preferred_element_type=jnp.float32
    ).astype(out_ref.dtype)


def joint_mapper(joints: jax.Array, joint_maps=None, *, force_pallas: bool = False):
    """Pallas equivalent of JointMapper.forward (gather along axis 1)."""
    if joint_maps is None:
        return joints

    # Host-known index buffer (the register_buffer case): plain fused XLA gather.
    if isinstance(joint_maps, (np.ndarray, list, tuple)):
        idx = jnp.asarray(np.asarray(joint_maps), dtype=jnp.int32)
        return jnp.take(joints, idx, axis=1)

    B, J, D = joints.shape
    K = int(joint_maps.shape[0])
    itemsize = int(joints.dtype.itemsize)

    payload_bytes = B * max(J, K) * D * itemsize
    dtype_ok = joints.dtype in (jnp.float32, jnp.bfloat16)
    if not dtype_ok or (not force_pallas and payload_bytes < _PALLAS_MIN_BYTES):
        # Tiny payload or non-float dtype: the fused XLA gather wins.
        return jnp.take(joints, joint_maps, axis=1)

    # Clamp indices (matches jnp.take's OOB behavior, keeps both paths consistent).
    idx = jnp.clip(joint_maps.astype(jnp.int32), 0, J - 1)
    # Flattened source column for each output column: column c of the (B, K*D)
    # output pulls element idx[c//D]*D + (c%D) of the row-flattened (J*D,) joints.
    target = (idx[:, None] * D + jnp.arange(D, dtype=jnp.int32)[None, :]).reshape(1, K * D)

    x = joints.reshape(B, J * D)  # contiguous view, no transpose / no extra HBM pass

    tb = B if B <= _BATCH_TILE else _BATCH_TILE
    grid = (pl.cdiv(B, tb),)

    out_flat = pl.pallas_call(
        _gather_joints_kernel,
        out_shape=jax.ShapeDtypeStruct((B, K * D), joints.dtype),
        grid=grid,
        in_specs=[
            pl.BlockSpec((1, K * D), lambda b: (0, 0)),     # grid-invariant targets
            pl.BlockSpec((tb, J * D), lambda b: (b, 0)),    # batch tile of joints
        ],
        out_specs=pl.BlockSpec((tb, K * D), lambda b: (b, 0)),
        compiler_params=pltpu.CompilerParams(
            dimension_semantics=("parallel",),
        ),
        cost_estimate=pl.CostEstimate(
            flops=2 * B * (J * D) * (K * D),
            transcendentals=0,
            bytes_accessed=B * (J * D + K * D) * itemsize + K * D * 4,
        ),
    )(target, x)

    # (B, K*D) -> (B, K, D) is a pure view.
    return out_flat.reshape(B, K, D)


if __name__ == "__main__":
    key = jax.random.PRNGKey(0)
    k0, k1, k2 = jax.random.split(key, 3)

    # ---- small SMPL-like shapes (batch=2, 16 joints, 3D), Pallas path forced ----
    B, J, D, K = 2, 16, 3, 8
    joints = jax.random.normal(k0, (B, J, D), dtype=jnp.float32)
    joint_maps_np = np.array([5, 0, 3, 12, 7, 1, 15, 9], dtype=np.int32)
    joint_maps_dev = jnp.asarray(joint_maps_np)

    out = jax.block_until_ready(joint_mapper(joints, joint_maps_dev, force_pallas=True))
    ref = jnp.take(joints, joint_maps_dev, axis=1)
    assert out.shape == (B, K, D)
    np.testing.assert_allclose(np.asarray(out), np.asarray(ref), rtol=1e-6, atol=1e-6)

    # ---- larger batch: exercises the tiled "parallel" grid path via the size gate ----
    B2, J2, K2 = 1024, 55, 118
    joints2 = jax.random.normal(k1, (B2, J2, D), dtype=jnp.float32)
    joint_maps2 = jax.random.randint(k2, (K2,), 0, J2, dtype=jnp.int32)

    out2 = jax.block_until_ready(joint_mapper(joints2, joint_maps2))
    ref2 = jnp.take(joints2, joint_maps2, axis=1)
    assert out2.shape == (B2, K2, D)
    np.testing.assert_allclose(np.asarray(out2), np.asarray(ref2), rtol=1e-6, atol=1e-6)

    # ---- host-resident index buffer (register_buffer case): fused XLA gather ----
    out_static = joint_mapper(joints, joint_maps_np)
    np.testing.assert_allclose(np.asarray(out_static), np.asarray(ref), rtol=0, atol=0)

    # ---- None case: identity passthrough ----
    ident = joint_mapper(joints, None)
    np.testing.assert_allclose(np.asarray(ident), np.asarray(joints), rtol=0, atol=0)

    print("KERNEL_OK")
</pallas_src>

<mosaic_0001>
module attributes {stable_mosaic.version = 11 : i64} {
  func.func @_gather_joints_kernel(%arg0: i32, %arg1: memref<1x24xi32, #tpu.memory_space<vmem>>, %arg2: memref<2x48xf32, #tpu.memory_space<vmem>>, %arg3: memref<2x24xf32, #tpu.memory_space<vmem>>) attributes {dimension_semantics = [#tpu.dimension_semantics<parallel>], iteration_bounds = array<i64: 1>, scalar_prefetch = 0 : i64, scratch_operands = 0 : i64, tpu.core_type = #tpu.core_type<tc>, window_params = [{pipeline_mode = #tpu.pipeline_mode<synchronous>, transform_indices = @transform_0, window_bounds = array<i64: 1, 24>}, {transform_indices = @transform_1, window_bounds = array<i64: 2, 48>}, {transform_indices = @transform_2, window_bounds = array<i64: 2, 24>}]} {
    %0 = tpu.iota {dimensions = array<i32: 0>} : vector<48x24xi32>
    %c0 = arith.constant 0 : index
    %c0_0 = arith.constant 0 : index
    %1 = vector.load %arg1[%c0, %c0_0] : memref<1x24xi32, #tpu.memory_space<vmem>>, vector<1x24xi32>
    %2 = vector.broadcast %1 : vector<1x24xi32> to vector<48x24xi32>
    %3 = arith.cmpi eq, %0, %2 : vector<48x24xi32>
    %4 = arith.extui %3 : vector<48x24xi1> to vector<48x24xi32>
    %5 = arith.sitofp %4 : vector<48x24xi32> to vector<48x24xf32>
    %c0_1 = arith.constant 0 : index
    %c0_2 = arith.constant 0 : index
    %6 = vector.load %arg2[%c0_1, %c0_2] : memref<2x48xf32, #tpu.memory_space<vmem>>, vector<2x48xf32>
    %cst = arith.constant dense<0.000000e+00> : vector<2x24xf32>
    %7 = tpu.matmul %6, %5, %cst {dimension_numbers = #tpu.dot_dimension_numbers<[1], [0], [0], [1], [0, 0, 1, 1], [], []>} : vector<2x48xf32>, vector<48x24xf32>, vector<2x24xf32> -> vector<2x24xf32>
    %c0_3 = arith.constant 0 : index
    %c0_4 = arith.constant 0 : index
    %8 = vector.load %arg3[%c0_3, %c0_4] : memref<2x24xf32, #tpu.memory_space<vmem>>, vector<2x24xf32>
    tpu.vector_store %arg3[%c0_3, %c0_4], %7 {strides = array<i32>} : memref<2x24xf32, #tpu.memory_space<vmem>>, vector<2x24xf32>,
    return
  }
  func.func @transform_0(%arg0: i32) -> (i32, i32) {
    %c0_i32 = arith.constant 0 : i32
    %c0_i32_0 = arith.constant 0 : i32
    %c0_i32_1 = arith.constant 0 : i32
    return %c0_i32, %c0_i32_0 : i32, i32
  }
  func.func @transform_1(%arg0: i32) -> (i32, i32) {
    %c0_i32 = arith.constant 0 : i32
    %c0_i32_0 = arith.constant 0 : i32
    return %arg0, %c0_i32 : i32, i32
  }
  func.func @transform_2(%arg0: i32) -> (i32, i32) {
    %c0_i32 = arith.constant 0 : i32
    %c0_i32_0 = arith.constant 0 : i32
    return %arg0, %c0_i32 : i32, i32
  }
}

</mosaic_0001>

<llo_original>
// kernel: tpu_custom_call.1
$region0: #{tpu_custom_call.1}
  #allocation0 [shape = 'u32[]', space=smem, size = 0x4, offset = 0x4, fixed_abs, tag = 'smem constant byte address 0x4 - core index']
  #allocation1 [shape = 'u32[144,128]{1,0:T(1,128)}', space=vmem, size = 0x12000, scoped, tag = 'internal scratch']
  %s0 = inlined_call_operand.hbm [shape: s32[1,24], index: 0, kind: input, shape index: {}]
  %s1 = inlined_call_operand.vmem [shape: f32[2,48], index: 1, kind: input, shape index: {}]
  %s2 = inlined_call_operand.hbm [shape: f32[2,24], index: 2, kind: output, shape index: {}]
  %s3 = sld [smem:[#allocation0]]
  $region22: #{tpu_custom_call.1} parent=0
    _
  %s5 = ssub.s32 1, %s3
  %s6 = scalar_select 0, %s5, %s3
  $region1: #{tpu_custom_call.1} parent=0
    #allocation2 [shape = 'u8[512]{0}', space=vmem, size = 0x400, scoped, tag = 'input window, operand 0, single buffered']
    #allocation3 [shape = 's32[1]{0}', space=sflag, size = 0x4, scoped, tag = 'scoped memory for tpu_custom_call.1']
    #allocation4 [shape = 's32[1]{0}', space=sflag, size = 0x4, scoped, tag = 'scoped memory for tpu_custom_call.1']
    #allocation5 [shape = 'u8[1024]{0}', space=vmem, size = 0x400, scoped, tag = 'output window, operand 0, single buffered']
    %7 = vsyncpa [#allocation3], 0
    %8 = vsyncpa [#allocation4], 0
    // Predicated region
    $region2: #{tpu_custom_call.1} parent=1 // pred_check
      _
    $region3: #{tpu_custom_call.1} parent=1 // pred_check_branch
      %10 = sbr.rel (0) target = $region5
    $region4: #{tpu_custom_call.1} parent=1 // pred_region
      %s12 = ssub.s32 16, 16
      %13 = vsyncadd [#allocation3], %s12
      %s15 = sshll.u32 [#allocation2], 4
      %s16 = int_to_ptr.vmem [resolvable:$true] %s15
      %18 = dma.hbm_to_vmem [thread:$0]  %s0, 16, %s16, [#allocation3]
    $region5: #{tpu_custom_call.1} parent=1 // pred_fallthru
      _
    // Predicated region
    $region6: #{tpu_custom_call.1} parent=1 // pred_check
      _
    $region7: #{tpu_custom_call.1} parent=1 // pred_check_branch
      %20 = sbr.rel (0) target = $region9
    $region8: #{tpu_custom_call.1} parent=1 // pred_region
      _
    $region9: #{tpu_custom_call.1} parent=1 // pred_fallthru
      _
    // Predicated region
    $region10: #{tpu_custom_call.1} parent=1 // pred_check
      _
    $region11: #{tpu_custom_call.1} parent=1 // pred_check_branch
      %22 = sbr.rel (0) target = $region13
    $region12: #{tpu_custom_call.1} parent=1 // pred_region
      %23 = dma.done [#allocation3], 16
    $region13: #{tpu_custom_call.1} parent=1 // pred_fallthru
      _
    %v24 = vlaneseq
    %v25 = vshrl.u32 %v24, 7
    %v26 = vadd.s32 %v25, 8
    %v27 = vadd.s32 %v25, 16
    %v28 = vadd.s32 %v25, 24
    %v29 = vadd.s32 %v25, 32
    %v30 = vadd.s32 %v25, 40
    %v31 = vld [vmem:[#allocation2] sm:$0x1]
    %v32 = vlaneseq
    %v33 = vshrl.u32 %v32, 7
    %v34 = vsub.s32 0, %v33
    %v35 = vrot.slane %v31, %v34
    %vm36 = vcmp.eq.s32.totalorder %v25, %v35
    %vm37 = vcmp.eq.s32.totalorder %v26, %v35
    %vm38 = vcmp.eq.s32.totalorder %v27, %v35
    %vm39 = vcmp.eq.s32.totalorder %v28, %v35
    %vm40 = vcmp.eq.s32.totalorder %v29, %v35
    %vm41 = vcmp.eq.s32.totalorder %v30, %v35
    %v42 = vsel %vm36, 1, 0
    %v43 = vsel %vm37, 1, 0
    %v44 = vsel %vm38, 1, 0
    %v45 = vsel %vm39, 1, 0
    %v46 = vsel %vm40, 1, 0
    %v47 = vsel %vm41, 1, 0
    %v48 = vcvt.s32.f32 %v42
    %v49 = vcvt.s32.f32 %v43
    %v50 = vcvt.s32.f32 %v44
    %v51 = vcvt.s32.f32 %v45
    %v52 = vcvt.s32.f32 %v46
    %v53 = vcvt.s32.f32 %v47
    %v54 = vld [vmem:[%s1] sm:$0x3]
    %vm55 = vcmask 392192
    %v57 = vsel %vm55, %v54, 0
    %59 = vmatprep.subr.mxu0 0.0
    %60 = vmatpush1.msra.mxu0 %v48
    %61 = vmatprep.subr.mxu0 0.0
    %62 = vmatpush1.msra.mxu0 %v49
    %63 = vmatprep.subr.mxu0 0.0
    %64 = vmatpush1.msra.mxu0 %v50
    %65 = vmatprep.subr.mxu0 0.0
    %66 = vmatpush1.msra.mxu0 %v51
    %67 = vmatprep.subr.mxu0 0.0
    %68 = vmatpush1.msra.mxu0 %v52
    %69 = vmatprep.subr.mxu0 0.0
    %70 = vmatpush1.msra.mxu0 %v53
    %71 = vmatprep.subr.mxu0 0.0
    %72 = vmatpush1.msra.mxu0 0.0
    %73 = vmatprep.subr.mxu0 0.0
    %74 = vmatpush1.msra.mxu0 0.0
    %75 = vmatprep.subr.mxu0 0.0
    %76 = vmatpush1.msra.mxu0 0.0
    %77 = vmatprep.subr.mxu0 0.0
    %78 = vmatpush1.msra.mxu0 0.0
    %79 = vmatprep.subr.mxu0 0.0
    %80 = vmatpush1.msra.mxu0 0.0
    %81 = vmatprep.subr.mxu0 0.0
    %82 = vmatpush1.msra.mxu0 0.0
    %83 = vmatprep.subr.mxu0 0.0
    %84 = vmatpush1.msra.mxu0 0.0
    %85 = vmatprep.subr.mxu0 0.0
    %86 = vmatpush1.msra.mxu0 0.0
    %87 = vmatprep.subr.mxu0 0.0
    %88 = vmatpush1.msra.mxu0 0.0
    %89 = vmatprep.subr.mxu0 0.0
    %90 = vmatpush1.msra.mxu0 0.0
    %91 = vmatprep.subr.mxu0 0.0
    %92 = vmatpush1.msra.mxu0 0.0
    %93 = vmatprep.subr.mxu0 0.0
    %94 = vmatpush1.msra.mxu0 0.0
    %95 = vmatprep.subr.mxu0 0.0
    %96 = vmatpush1.msra.mxu0 0.0
    %97 = vmatprep.subr.mxu0 0.0
    %98 = vmatpush1.msra.mxu0 0.0
    %99 = vmatprep.subr.mxu0 0.0
    %100 = vmatpush1.msra.mxu0 0.0
    %101 = vmatprep.subr.mxu0 0.0
    %102 = vmatpush1.msra.mxu0 0.0
    %103 = vmatprep.subr.mxu0 0.0
    %104 = vmatpush1.msra.mxu0 0.0
    %105 = vmatprep.subr.mxu0 0.0
    %106 = vmatpush1.msra.mxu0 0.0
    %107 = vmatprep.subr.mxu0 0.0
    %108 = vmatpush1.msra.mxu0 0.0
    %109 = vmatprep.subr.mxu0 0.0
    %110 = vmatpush1.msra.mxu0 0.0
    %111 = vmatprep.subr.mxu0 0.0
    %112 = vmatpush1.msra.mxu0 0.0
    %113 = vmatprep.subr.mxu0 0.0
    %114 = vmatpush1.msra.mxu0 0.0
    %115 = vmatprep.subr.mxu0 0.0
    %116 = vmatpush1.msra.mxu0 0.0
    %117 = vmatprep.subr.mxu0 0.0
    %118 = vmatpush1.msra.mxu0 0.0
    %119 = vmatprep.subr.mxu0 0.0
    %120 = vmatpush1.msra.mxu0 0.0
    %121 = vmatprep.subr.mxu0 0.0
    %122 = vmatpush1.msra.mxu0 0.0
    %123 = vmatprep.mubr.f32.mxu0 0.0
    %124 = vmatmul.mubr.f32.gmra.mrb[0].mxu0 %v57
    %v125 = vpop.f32.mrb[0].mxu0
    %v126 = vadd.f32 0.0, %v125
    %v127 = vpop.f32.mrb[0].mxu0
    %128 = vdwg.mxu0
    %vm129 = vcmask 189440
    %130 = vst.msk [vmem:[#allocation5] sm:$0x3] %vm129, %v126
    // Predicated region
    $region14: #{tpu_custom_call.1} parent=1 // pred_check
      _
    $region15: #{tpu_custom_call.1} parent=1 // pred_check_branch
      %132 = sbr.rel (0) target = $region17
    $region16: #{tpu_custom_call.1} parent=1 // pred_region
      %s134 = ssub.s32 32, 32
      %135 = vsyncadd [#allocation4], %s134
      %s137 = sshll.u32 [#allocation5], 4
      %s138 = int_to_ptr.vmem [resolvable:$true] %s137
      %140 = dma.vmem_to_hbm [thread:$0]  %s138, 32, %s2, [#allocation4]
    $region17: #{tpu_custom_call.1} parent=1 // pred_fallthru
      _
    // Predicated region
    $region18: #{tpu_custom_call.1} parent=1 // pred_check
      _
    $region19: #{tpu_custom_call.1} parent=1 // pred_check_branch
      %142 = sbr.rel (0) target = $region21
    $region20: #{tpu_custom_call.1} parent=1 // pred_region
      %143 = dma.done [#allocation4], 32
    $region21: #{tpu_custom_call.1} parent=1 // pred_fallthru
      _
    %144 = vsyncpa [#allocation3], 1
    %145 = vsyncpa [#allocation4], 1

</llo_original>
